<compile_context>
chip_gen: v5e
topology: v5e:2x2
jax: 0.10.0
libtpu: 0.0.40
codegen_flags: <defaults>
</compile_context>

<pallas_src>
import jax
import jax.numpy as jnp
from jax.experimental import pallas as pl
from jax.experimental.pallas import tpu as pltpu

WINDOW_SIZE = 11
SIGMA = 1.5
C1 = 0.01 ** 2
C2 = 0.03 ** 2


def _loss_kernel(a_ref, b5_ref, x1_ref, x2_ref, mse_ref, ssim_ref):
    # a_ref : (M, M)    block-diagonal 'same' row-blur matrix, M = ct * H
    # b5_ref: (5W, 5W)  block-diagonal 'same' col-blur matrix (one block / operand)
    # x1_ref, x2_ref: (M, W)  ct channels stacked along sublanes
    # mse_ref, ssim_ref: (1, W) running accumulators (resident across the grid)
    @pl.when(pl.program_id(0) == 0)
    def _init():
        mse_ref[...] = jnp.zeros_like(mse_ref)
        ssim_ref[...] = jnp.zeros_like(ssim_ref)

    x1 = x1_ref[...].astype(jnp.float32)
    x2 = x2_ref[...].astype(jnp.float32)
    w = x1.shape[1]

    # MSE partial: sum of squared diffs, reduced over sublanes only.
    d = x1 - x2
    mse_ref[...] += jnp.sum(d * d, axis=0, keepdims=True)

    # Fused separable Gaussian blur of all five SSIM operands:
    # one row-blur matmul + one col-blur matmul.
    ops = jnp.concatenate([x1, x2, x1 * x1, x2 * x2, x1 * x2], axis=1)   # (M, 5W)
    rb = jnp.dot(a_ref[...], ops, preferred_element_type=jnp.float32)    # (M, 5W)
    cb = jnp.dot(rb, b5_ref[...], preferred_element_type=jnp.float32)    # (M, 5W)

    mu1 = cb[:, 0 * w:1 * w]
    mu2 = cb[:, 1 * w:2 * w]
    b11 = cb[:, 2 * w:3 * w]
    b22 = cb[:, 3 * w:4 * w]
    b12 = cb[:, 4 * w:5 * w]

    mu1_sq = mu1 * mu1
    mu2_sq = mu2 * mu2
    mu1_mu2 = mu1 * mu2
    sigma1_sq = b11 - mu1_sq
    sigma2_sq = b22 - mu2_sq
    sigma12 = b12 - mu1_mu2

    num = (2.0 * mu1_mu2 + C1) * (2.0 * sigma12 + C2)
    den = (mu1_sq + mu2_sq + C1) * (sigma1_sq + sigma2_sq + C2)
    ssim_map = num * pl.reciprocal(den, approx=True)
    ssim_ref[...] += jnp.sum(ssim_map, axis=0, keepdims=True)


def _gaussian_1d(window_size, sigma):
    x = jnp.arange(window_size, dtype=jnp.float32)
    g = jnp.exp(-((x - window_size // 2) ** 2) / (2.0 * sigma ** 2))
    return g / jnp.sum(g)


def _banded_same_conv_matrix(n, window_size=WINDOW_SIZE, sigma=SIGMA):
    """Symmetric banded matrix M with M[i, j] = g[j - i + pad] on the band,
    so that M @ X (or X @ M) equals a zero-padded 'same' 1D Gaussian conv."""
    g = _gaussian_1d(window_size, sigma)
    pad = window_size // 2
    off = jnp.arange(n)[None, :] - jnp.arange(n)[:, None] + pad          # (n, n)
    band = (off >= 0) & (off < window_size)
    return jnp.where(band, g[jnp.clip(off, 0, window_size - 1)], 0.0).astype(jnp.float32)


def _pick_channels_per_block(n, h, w):
    """Channels per grid step: aim for ~256 sublanes / modest VMEM, and pick a
    divisor of n (so no remainder masking is needed) with (ct*h) % 8 == 0."""
    by_rows = max(1, 256 // max(h, 1))
    by_bytes = max(1, (2 * 1024 * 1024) // max(h * w * 4, 1))
    target = max(1, min(n, by_rows, by_bytes))
    for ct in range(target, 0, -1):
        if n % ct == 0 and (ct * h) % 8 == 0:
            return ct
    return n  # fallback: single block == full array dims (always legal)


def mse_and_ssim_loss(img1, img2, alpha=0.95):
    """Equivalent of MSE_and_SSIM_loss.forward for NCHW inputs."""
    B, C, H, W = img1.shape
    N = B * C

    # Free reshapes (no HBM pass): channels stacked along the sublane axis.
    x1 = img1.reshape(N * H, W)
    x2 = img2.reshape(N * H, W)

    ct = _pick_channels_per_block(N, H, W)
    m = ct * H

    A = _banded_same_conv_matrix(H)                       # (H, H) row blur
    Bm = _banded_same_conv_matrix(W)                      # (W, W) col blur
    a_big = jnp.kron(jnp.eye(ct, dtype=jnp.float32), A)   # (m, m) per-channel row blur
    b5 = jnp.kron(jnp.eye(5, dtype=jnp.float32), Bm)      # (5W, 5W) per-operand col blur

    grid = (N // ct,)
    mse_rows, ssim_rows = pl.pallas_call(
        _loss_kernel,
        out_shape=(jax.ShapeDtypeStruct((1, W), jnp.float32),
                   jax.ShapeDtypeStruct((1, W), jnp.float32)),
        grid_spec=pltpu.PrefetchScalarGridSpec(
            num_scalar_prefetch=0,
            grid=grid,
            in_specs=[
                pl.BlockSpec((m, m), lambda i: (0, 0)),
                pl.BlockSpec((5 * W, 5 * W), lambda i: (0, 0)),
                pl.BlockSpec((m, W), lambda i: (i, 0)),
                pl.BlockSpec((m, W), lambda i: (i, 0)),
            ],
            out_specs=[
                pl.BlockSpec((1, W), lambda i: (0, 0)),
                pl.BlockSpec((1, W), lambda i: (0, 0)),
            ],
        ),
        compiler_params=pltpu.CompilerParams(
            dimension_semantics=("arbitrary",)),
    )(a_big, b5, x1, x2)

    n_elem = N * H * W
    mse = jnp.sum(mse_rows) / n_elem          # nn.MSELoss() -> mean
    ssim = jnp.sum(ssim_rows) / n_elem        # SSIM() -> mean over ssim_map
    return alpha * mse + (1.0 - alpha) * (1.0 - ssim)


if __name__ == "__main__":
    key = jax.random.PRNGKey(0)
    k1, k2 = jax.random.split(key)
    B, Cc, H, W = 2, 4, 16, 16
    img1 = jax.random.uniform(k1, (B, Cc, H, W), dtype=jnp.float32)
    img2 = jnp.clip(img1 + 0.05 * jax.random.normal(k2, (B, Cc, H, W), dtype=jnp.float32),
                    0.0, 1.0)

    loss = mse_and_ssim_loss(img1, img2, alpha=0.95)
    loss = jax.block_until_ready(loss)
    assert jnp.isfinite(loss), "loss is not finite"
    print("KERNEL_OK")
</pallas_src>

<mosaic_0001>
module attributes {stable_mosaic.version = 11 : i64} {
  func.func @_loss_kernel(%arg0: i32, %arg1: memref<128x128xf32, #tpu.memory_space<vmem>>, %arg2: memref<80x80xf32, #tpu.memory_space<vmem>>, %arg3: memref<128x16xf32, #tpu.memory_space<vmem>>, %arg4: memref<128x16xf32, #tpu.memory_space<vmem>>, %arg5: memref<1x16xf32, #tpu.memory_space<vmem>>, %arg6: memref<1x16xf32, #tpu.memory_space<vmem>>) attributes {dimension_semantics = [#tpu.dimension_semantics<arbitrary>], iteration_bounds = array<i64: 1>, scalar_prefetch = 0 : i64, scratch_operands = 0 : i64, tpu.core_type = #tpu.core_type<tc>, window_params = [{pipeline_mode = #tpu.pipeline_mode<synchronous>, transform_indices = @transform_0, window_bounds = array<i64: 128, 128>}, {pipeline_mode = #tpu.pipeline_mode<synchronous>, transform_indices = @transform_1, window_bounds = array<i64: 80, 80>}, {transform_indices = @transform_2, window_bounds = array<i64: 128, 16>}, {transform_indices = @transform_3, window_bounds = array<i64: 128, 16>}, {pipeline_mode = #tpu.pipeline_mode<synchronous>, transform_indices = @transform_4, window_bounds = array<i64: 1, 16>}, {pipeline_mode = #tpu.pipeline_mode<synchronous>, transform_indices = @transform_5, window_bounds = array<i64: 1, 16>}]} {
    %c0_i32 = arith.constant 0 : i32
    %0 = arith.cmpi eq, %arg0, %c0_i32 : i32
    %1 = arith.extui %0 : i1 to i32
    %c0_i32_0 = arith.constant 0 : i32
    %2 = arith.cmpi ne, %1, %c0_i32_0 : i32
    scf.if %2 {
      %cst_25 = arith.constant 0.000000e+00 : f32
      %54 = vector.broadcast %cst_25 : f32 to vector<1x16xf32>
      %c0_26 = arith.constant 0 : index
      %c0_27 = arith.constant 0 : index
      %55 = vector.load %arg5[%c0_26, %c0_27] : memref<1x16xf32, #tpu.memory_space<vmem>>, vector<1x16xf32>
      tpu.vector_store %arg5[%c0_26, %c0_27], %54 {strides = array<i32>} : memref<1x16xf32, #tpu.memory_space<vmem>>, vector<1x16xf32>,
      %cst_28 = arith.constant 0.000000e+00 : f32
      %56 = vector.broadcast %cst_28 : f32 to vector<1x16xf32>
      %c0_29 = arith.constant 0 : index
      %c0_30 = arith.constant 0 : index
      %57 = vector.load %arg6[%c0_29, %c0_30] : memref<1x16xf32, #tpu.memory_space<vmem>>, vector<1x16xf32>
      tpu.vector_store %arg6[%c0_29, %c0_30], %56 {strides = array<i32>} : memref<1x16xf32, #tpu.memory_space<vmem>>, vector<1x16xf32>,
    } else {
    }
    %c0 = arith.constant 0 : index
    %c0_1 = arith.constant 0 : index
    %3 = vector.load %arg3[%c0, %c0_1] : memref<128x16xf32, #tpu.memory_space<vmem>>, vector<128x16xf32>
    %c0_2 = arith.constant 0 : index
    %c0_3 = arith.constant 0 : index
    %4 = vector.load %arg4[%c0_2, %c0_3] : memref<128x16xf32, #tpu.memory_space<vmem>>, vector<128x16xf32>
    %5 = arith.subf %3, %4 : vector<128x16xf32>
    %c0_4 = arith.constant 0 : index
    %c0_5 = arith.constant 0 : index
    %6 = vector.load %arg5[%c0_4, %c0_5] : memref<1x16xf32, #tpu.memory_space<vmem>>, vector<1x16xf32>
    %7 = arith.mulf %5, %5 : vector<128x16xf32>
    %cst = arith.constant dense<0.000000e+00> : vector<16xf32>
    %8 = vector.multi_reduction <add>, %7, %cst [0] : vector<128x16xf32> to vector<16xf32>
    %9 = vector.shape_cast %8 : vector<16xf32> to vector<1x16xf32>
    %10 = arith.addf %6, %9 : vector<1x16xf32>
    %c0_6 = arith.constant 0 : index
    %c0_7 = arith.constant 0 : index
    %11 = vector.load %arg5[%c0_6, %c0_7] : memref<1x16xf32, #tpu.memory_space<vmem>>, vector<1x16xf32>
    tpu.vector_store %arg5[%c0_6, %c0_7], %10 {strides = array<i32>} : memref<1x16xf32, #tpu.memory_space<vmem>>, vector<1x16xf32>,
    %12 = arith.mulf %3, %3 : vector<128x16xf32>
    %13 = arith.mulf %4, %4 : vector<128x16xf32>
    %14 = arith.mulf %3, %4 : vector<128x16xf32>
    %15 = tpu.concatenate %3, %4, %12, %13, %14 in 1 : vector<128x16xf32>, vector<128x16xf32>, vector<128x16xf32>, vector<128x16xf32>, vector<128x16xf32> -> vector<128x80xf32>
    %c0_8 = arith.constant 0 : index
    %c0_9 = arith.constant 0 : index
    %16 = vector.load %arg1[%c0_8, %c0_9] : memref<128x128xf32, #tpu.memory_space<vmem>>, vector<128x128xf32>
    %cst_10 = arith.constant dense<0.000000e+00> : vector<128x80xf32>
    %17 = tpu.matmul %16, %15, %cst_10 {dimension_numbers = #tpu.dot_dimension_numbers<[1], [0], [0], [1], [0, 0, 1, 1], [], []>} : vector<128x128xf32>, vector<128x80xf32>, vector<128x80xf32> -> vector<128x80xf32>
    %c0_11 = arith.constant 0 : index
    %c0_12 = arith.constant 0 : index
    %18 = vector.load %arg2[%c0_11, %c0_12] : memref<80x80xf32, #tpu.memory_space<vmem>>, vector<80x80xf32>
    %cst_13 = arith.constant dense<0.000000e+00> : vector<128x80xf32>
    %19 = tpu.matmul %17, %18, %cst_13 {dimension_numbers = #tpu.dot_dimension_numbers<[1], [0], [0], [1], [0, 0, 1, 1], [], []>} : vector<128x80xf32>, vector<80x80xf32>, vector<128x80xf32> -> vector<128x80xf32>
    %20 = vector.extract_strided_slice %19 {offsets = [0, 0], sizes = [128, 16], strides = [1, 1]} : vector<128x80xf32> to vector<128x16xf32>
    %21 = vector.extract_strided_slice %19 {offsets = [0, 16], sizes = [128, 16], strides = [1, 1]} : vector<128x80xf32> to vector<128x16xf32>
    %22 = vector.extract_strided_slice %19 {offsets = [0, 32], sizes = [128, 16], strides = [1, 1]} : vector<128x80xf32> to vector<128x16xf32>
    %23 = vector.extract_strided_slice %19 {offsets = [0, 48], sizes = [128, 16], strides = [1, 1]} : vector<128x80xf32> to vector<128x16xf32>
    %24 = vector.extract_strided_slice %19 {offsets = [0, 64], sizes = [128, 16], strides = [1, 1]} : vector<128x80xf32> to vector<128x16xf32>
    %25 = arith.mulf %20, %20 : vector<128x16xf32>
    %26 = arith.mulf %21, %21 : vector<128x16xf32>
    %27 = arith.mulf %20, %21 : vector<128x16xf32>
    %28 = arith.subf %22, %25 : vector<128x16xf32>
    %29 = arith.subf %23, %26 : vector<128x16xf32>
    %30 = arith.subf %24, %27 : vector<128x16xf32>
    %cst_14 = arith.constant 2.000000e+00 : f32
    %31 = vector.broadcast %cst_14 : f32 to vector<128x16xf32>
    %32 = arith.mulf %31, %27 : vector<128x16xf32>
    %cst_15 = arith.constant 9.99999974E-5 : f32
    %33 = vector.broadcast %cst_15 : f32 to vector<128x16xf32>
    %34 = arith.addf %32, %33 : vector<128x16xf32>
    %cst_16 = arith.constant 2.000000e+00 : f32
    %35 = vector.broadcast %cst_16 : f32 to vector<128x16xf32>
    %36 = arith.mulf %35, %30 : vector<128x16xf32>
    %cst_17 = arith.constant 8.99999984E-4 : f32
    %37 = vector.broadcast %cst_17 : f32 to vector<128x16xf32>
    %38 = arith.addf %36, %37 : vector<128x16xf32>
    %39 = arith.mulf %34, %38 : vector<128x16xf32>
    %40 = arith.addf %25, %26 : vector<128x16xf32>
    %cst_18 = arith.constant 9.99999974E-5 : f32
    %41 = vector.broadcast %cst_18 : f32 to vector<128x16xf32>
    %42 = arith.addf %40, %41 : vector<128x16xf32>
    %43 = arith.addf %28, %29 : vector<128x16xf32>
    %cst_19 = arith.constant 8.99999984E-4 : f32
    %44 = vector.broadcast %cst_19 : f32 to vector<128x16xf32>
    %45 = arith.addf %43, %44 : vector<128x16xf32>
    %46 = arith.mulf %42, %45 : vector<128x16xf32>
    %47 = tpu.reciprocal %46 {approx = true} : vector<128x16xf32> -> vector<128x16xf32>
    %48 = arith.mulf %39, %47 : vector<128x16xf32>
    %c0_20 = arith.constant 0 : index
    %c0_21 = arith.constant 0 : index
    %49 = vector.load %arg6[%c0_20, %c0_21] : memref<1x16xf32, #tpu.memory_space<vmem>>, vector<1x16xf32>
    %cst_22 = arith.constant dense<0.000000e+00> : vector<16xf32>
    %50 = vector.multi_reduction <add>, %48, %cst_22 [0] : vector<128x16xf32> to vector<16xf32>
    %51 = vector.shape_cast %50 : vector<16xf32> to vector<1x16xf32>
    %52 = arith.addf %49, %51 : vector<1x16xf32>
    %c0_23 = arith.constant 0 : index
    %c0_24 = arith.constant 0 : index
    %53 = vector.load %arg6[%c0_23, %c0_24] : memref<1x16xf32, #tpu.memory_space<vmem>>, vector<1x16xf32>
    tpu.vector_store %arg6[%c0_23, %c0_24], %52 {strides = array<i32>} : memref<1x16xf32, #tpu.memory_space<vmem>>, vector<1x16xf32>,
    return
  }
  func.func @transform_0(%arg0: i32) -> (i32, i32) {
    %c0_i32 = arith.constant 0 : i32
    %c0_i32_0 = arith.constant 0 : i32
    %c0_i32_1 = arith.constant 0 : i32
    return %c0_i32, %c0_i32_0 : i32, i32
  }
  func.func @transform_1(%arg0: i32) -> (i32, i32) {
    %c0_i32 = arith.constant 0 : i32
    %c0_i32_0 = arith.constant 0 : i32
    %c0_i32_1 = arith.constant 0 : i32
    return %c0_i32, %c0_i32_0 : i32, i32
  }
  func.func @transform_2(%arg0: i32) -> (i32, i32) {
    %c0_i32 = arith.constant 0 : i32
    %c0_i32_0 = arith.constant 0 : i32
    return %arg0, %c0_i32 : i32, i32
  }
  func.func @transform_3(%arg0: i32) -> (i32, i32) {
    %c0_i32 = arith.constant 0 : i32
    %c0_i32_0 = arith.constant 0 : i32
    return %arg0, %c0_i32 : i32, i32
  }
  func.func @transform_4(%arg0: i32) -> (i32, i32) {
    %c0_i32 = arith.constant 0 : i32
    %c0_i32_0 = arith.constant 0 : i32
    %c0_i32_1 = arith.constant 0 : i32
    return %c0_i32, %c0_i32_0 : i32, i32
  }
  func.func @transform_5(%arg0: i32) -> (i32, i32) {
    %c0_i32 = arith.constant 0 : i32
    %c0_i32_0 = arith.constant 0 : i32
    %c0_i32_1 = arith.constant 0 : i32
    return %c0_i32, %c0_i32_0 : i32, i32
  }
}

</mosaic_0001>

<llo_original>
// kernel: tpu_custom_call.1
$region0: #{tpu_custom_call.1}
  #allocation0 [shape = 'u32[]', space=smem, size = 0x4, offset = 0x4, fixed_abs, tag = 'smem constant byte address 0x4 - core index']
  #allocation1 [shape = 'u32[72,128]{1,0:T(1,128)}', space=vmem, size = 0x9000, scoped, tag = 'internal scratch']
  %s0 = inlined_call_operand.vmem [shape: f32[128,128], index: 0, kind: input, shape index: {}]
  %s1 = inlined_call_operand.vmem [shape: f32[80,80], index: 1, kind: input, shape index: {}]
  %s2 = inlined_call_operand.vmem [shape: f32[128,16], index: 2, kind: input, shape index: {}]
  %s3 = inlined_call_operand.vmem [shape: f32[128,16], index: 3, kind: input, shape index: {}]
  %s4 = inlined_call_operand.hbm [shape: f32[1,16], index: 4, kind: output, shape index: {0}]
  %s5 = inlined_call_operand.hbm [shape: f32[1,16], index: 5, kind: output, shape index: {1}]
  %6 = xla_tuple %s4, %s5
  %s7 = sld [smem:[#allocation0]]
  $region38: #{tpu_custom_call.1} parent=0
    _
  %s9 = ssub.s32 1, %s7
  %s10 = scalar_select 0, %s9, %s7
  $region1: #{tpu_custom_call.1} parent=0
    #allocation2 [shape = 'u8[512]{0}', space=vmem, size = 0x400, scoped, tag = 'output window, operand 0, single buffered']
    #allocation3 [shape = 's32[1]{0}', space=sflag, size = 0x4, scoped, tag = 'scoped memory for tpu_custom_call.1']
    #allocation4 [shape = 'u8[512]{0}', space=vmem, size = 0x400, scoped, tag = 'output window, operand 1, single buffered']
    #allocation5 [shape = 's32[1]{0}', space=sflag, size = 0x4, scoped, tag = 'scoped memory for tpu_custom_call.1']
    %11 = vsyncpa [#allocation3], 0
    %12 = vsyncpa [#allocation5], 0
    // Predicated region
    $region2: #{tpu_custom_call.1} parent=1 // pred_check
      _
    $region3: #{tpu_custom_call.1} parent=1 // pred_check_branch
      %14 = sbr.rel (0) target = $region5
    $region4: #{tpu_custom_call.1} parent=1 // pred_region
      _
    $region5: #{tpu_custom_call.1} parent=1 // pred_fallthru
      _
    // Predicated region
    $region6: #{tpu_custom_call.1} parent=1 // pred_check
      _
    $region7: #{tpu_custom_call.1} parent=1 // pred_check_branch
      %16 = sbr.rel (0) target = $region9
    $region8: #{tpu_custom_call.1} parent=1 // pred_region
      _
    $region9: #{tpu_custom_call.1} parent=1 // pred_fallthru
      _
    // Predicated region
    $region10: #{tpu_custom_call.1} parent=1 // pred_check
      _
    $region11: #{tpu_custom_call.1} parent=1 // pred_check_branch
      %18 = sbr.rel (0) target = $region13
    $region12: #{tpu_custom_call.1} parent=1 // pred_region
      _
    $region13: #{tpu_custom_call.1} parent=1 // pred_fallthru
      _
    // Predicated region
    $region14: #{tpu_custom_call.1} parent=1 // pred_check
      _
    $region15: #{tpu_custom_call.1} parent=1 // pred_check_branch
      %20 = sbr.rel (0) target = $region17
    $region16: #{tpu_custom_call.1} parent=1 // pred_region
      _
    $region17: #{tpu_custom_call.1} parent=1 // pred_fallthru
      _
    %p21 = scmp.eq.s32.totalorder 0, 0
    // Predicated region
    $region18: #{tpu_custom_call.1} parent=1 // pred_check
      %p22 = pneg %p21
    $region19: #{tpu_custom_call.1} parent=1 // pred_check_branch
      %24 = sbr.rel (%p22) target = $region21
    $region20: #{tpu_custom_call.1} parent=1 // pred_region
      %vm25 = vcmask 122880
      %26 = vst.msk [vmem:[#allocation2] sm:$0x1] %vm25, 0.0
      %27 = vst.msk [vmem:[#allocation4] sm:$0x1] %vm25, 0.0
    $region21: #{tpu_custom_call.1} parent=1 // pred_fallthru
      _
    %v28 = vld [vmem:[%s2] sm:$0xff]
    %v29 = vld [vmem:[%s2 + $0x8] sm:$0xff]
    %v30 = vld [vmem:[%s2 + $0x10] sm:$0xff]
    %v31 = vld [vmem:[%s2 + $0x18] sm:$0xff]
    %v32 = vld [vmem:[%s2 + $0x20] sm:$0xff]
    %v33 = vld [vmem:[%s2 + $0x28] sm:$0xff]
    %v34 = vld [vmem:[%s2 + $0x30] sm:$0xff]
    %v35 = vld [vmem:[%s2 + $0x38] sm:$0xff]
    %v36 = vld [vmem:[%s2 + $0x40] sm:$0xff]
    %v37 = vld [vmem:[%s2 + $0x48] sm:$0xff]
    %v38 = vld [vmem:[%s2 + $0x50] sm:$0xff]
    %v39 = vld [vmem:[%s2 + $0x58] sm:$0xff]
    %v40 = vld [vmem:[%s2 + $0x60] sm:$0xff]
    %v41 = vld [vmem:[%s2 + $0x68] sm:$0xff]
    %v42 = vld [vmem:[%s2 + $0x70] sm:$0xff]
    %v43 = vld [vmem:[%s2 + $0x78] sm:$0xff]
    %v44 = vld [vmem:[%s3] sm:$0xff]
    %v45 = vld [vmem:[%s3 + $0x8] sm:$0xff]
    %v46 = vld [vmem:[%s3 + $0x10] sm:$0xff]
    %v47 = vld [vmem:[%s3 + $0x18] sm:$0xff]
    %v48 = vld [vmem:[%s3 + $0x20] sm:$0xff]
    %v49 = vld [vmem:[%s3 + $0x28] sm:$0xff]
    %v50 = vld [vmem:[%s3 + $0x30] sm:$0xff]
    %v51 = vld [vmem:[%s3 + $0x38] sm:$0xff]
    %v52 = vld [vmem:[%s3 + $0x40] sm:$0xff]
    %v53 = vld [vmem:[%s3 + $0x48] sm:$0xff]
    %v54 = vld [vmem:[%s3 + $0x50] sm:$0xff]
    %v55 = vld [vmem:[%s3 + $0x58] sm:$0xff]
    %v56 = vld [vmem:[%s3 + $0x60] sm:$0xff]
    %v57 = vld [vmem:[%s3 + $0x68] sm:$0xff]
    %v58 = vld [vmem:[%s3 + $0x70] sm:$0xff]
    %v59 = vld [vmem:[%s3 + $0x78] sm:$0xff]
    %v60 = vsub.f32 %v28, %v44
    %v61 = vsub.f32 %v29, %v45
    %v62 = vsub.f32 %v30, %v46
    %v63 = vsub.f32 %v31, %v47
    %v64 = vsub.f32 %v32, %v48
    %v65 = vsub.f32 %v33, %v49
    %v66 = vsub.f32 %v34, %v50
    %v67 = vsub.f32 %v35, %v51
    %v68 = vsub.f32 %v36, %v52
    %v69 = vsub.f32 %v37, %v53
    %v70 = vsub.f32 %v38, %v54
    %v71 = vsub.f32 %v39, %v55
    %v72 = vsub.f32 %v40, %v56
    %v73 = vsub.f32 %v41, %v57
    %v74 = vsub.f32 %v42, %v58
    %v75 = vsub.f32 %v43, %v59
    %v76 = vld [vmem:[#allocation2] sm:$0x1]
    %v77 = vmul.f32 %v60, %v60
    %v78 = vmul.f32 %v61, %v61
    %v79 = vmul.f32 %v62, %v62
    %v80 = vmul.f32 %v63, %v63
    %v81 = vmul.f32 %v64, %v64
    %v82 = vmul.f32 %v65, %v65
    %v83 = vmul.f32 %v66, %v66
    %v84 = vmul.f32 %v67, %v67
    %v85 = vmul.f32 %v68, %v68
    %v86 = vmul.f32 %v69, %v69
    %v87 = vmul.f32 %v70, %v70
    %v88 = vmul.f32 %v71, %v71
    %v89 = vmul.f32 %v72, %v72
    %v90 = vmul.f32 %v73, %v73
    %v91 = vmul.f32 %v74, %v74
    %v92 = vmul.f32 %v75, %v75
    %vm93 = vcmask 130048
    %v94 = vsel %vm93, %v77, 0.0
    %v95 = vsel %vm93, %v78, 0.0
    %v96 = vadd.f32 %v94, %v95
    %v97 = vsel %vm93, %v79, 0.0
    %v98 = vadd.f32 %v96, %v97
    %v99 = vsel %vm93, %v80, 0.0
    %v100 = vadd.f32 %v98, %v99
    %v101 = vsel %vm93, %v81, 0.0
    %v102 = vadd.f32 %v100, %v101
    %v103 = vsel %vm93, %v82, 0.0
    %v104 = vadd.f32 %v102, %v103
    %v105 = vsel %vm93, %v83, 0.0
    %v106 = vadd.f32 %v104, %v105
    %v107 = vsel %vm93, %v84, 0.0
    %v108 = vadd.f32 %v106, %v107
    %v109 = vsel %vm93, %v85, 0.0
    %v110 = vadd.f32 %v108, %v109
    %v111 = vsel %vm93, %v86, 0.0
    %v112 = vadd.f32 %v110, %v111
    %v113 = vsel %vm93, %v87, 0.0
    %v114 = vadd.f32 %v112, %v113
    %v115 = vsel %vm93, %v88, 0.0
    %v116 = vadd.f32 %v114, %v115
    %v117 = vsel %vm93, %v89, 0.0
    %v118 = vadd.f32 %v116, %v117
    %v119 = vsel %vm93, %v90, 0.0
    %v120 = vadd.f32 %v118, %v119
    %v121 = vsel %vm93, %v91, 0.0
    %v122 = vadd.f32 %v120, %v121
    %v123 = vsel %vm93, %v92, 0.0
    %v124 = vadd.f32 %v122, %v123
    %v125 = vrot.slane %v124, 4
    %v126 = vadd.f32 %v124, %v125
    %v127 = vrot.slane %v126, 2
    %v128 = vadd.f32 %v126, %v127
    %v129 = vrot.slane %v128, 1
    %v130 = vadd.f32 %v128, %v129
    %v131 = vadd.f32 %v76, %v130
    %vm132 = vcmask 122880
    %133 = vst.msk [vmem:[#allocation2] sm:$0x1] %vm132, %v131
    %v134 = vmul.f32 %v28, %v28
    %v135 = vmul.f32 %v29, %v29
    %v136 = vmul.f32 %v30, %v30
    %v137 = vmul.f32 %v31, %v31
    %v138 = vmul.f32 %v32, %v32
    %v139 = vmul.f32 %v33, %v33
    %v140 = vmul.f32 %v34, %v34
    %v141 = vmul.f32 %v35, %v35
    %v142 = vmul.f32 %v36, %v36
    %v143 = vmul.f32 %v37, %v37
    %v144 = vmul.f32 %v38, %v38
    %v145 = vmul.f32 %v39, %v39
    %v146 = vmul.f32 %v40, %v40
    %v147 = vmul.f32 %v41, %v41
    %v148 = vmul.f32 %v42, %v42
    %v149 = vmul.f32 %v43, %v43
    %v150 = vmul.f32 %v44, %v44
    %v151 = vmul.f32 %v45, %v45
    %v152 = vmul.f32 %v46, %v46
    %v153 = vmul.f32 %v47, %v47
    %v154 = vmul.f32 %v48, %v48
    %v155 = vmul.f32 %v49, %v49
    %v156 = vmul.f32 %v50, %v50
    %v157 = vmul.f32 %v51, %v51
    %v158 = vmul.f32 %v52, %v52
    %v159 = vmul.f32 %v53, %v53
    %v160 = vmul.f32 %v54, %v54
    %v161 = vmul.f32 %v55, %v55
    %v162 = vmul.f32 %v56, %v56
    %v163 = vmul.f32 %v57, %v57
    %v164 = vmul.f32 %v58, %v58
    %v165 = vmul.f32 %v59, %v59
    %v166 = vmul.f32 %v28, %v44
    %v167 = vmul.f32 %v29, %v45
    %v168 = vmul.f32 %v30, %v46
    %v169 = vmul.f32 %v31, %v47
    %v170 = vmul.f32 %v32, %v48
    %v171 = vmul.f32 %v33, %v49
    %v172 = vmul.f32 %v34, %v50
    %v173 = vmul.f32 %v35, %v51
    %v174 = vmul.f32 %v36, %v52
    %v175 = vmul.f32 %v37, %v53
    %v176 = vmul.f32 %v38, %v54
    %v177 = vmul.f32 %v39, %v55
    %v178 = vmul.f32 %v40, %v56
    %v179 = vmul.f32 %v41, %v57
    %v180 = vmul.f32 %v42, %v58
    %v181 = vmul.f32 %v43, %v59
    %198 = vrot.lane.b32.xlu0 %v44, 16
    %v199 = vpop.permute.xlu0 %198
    %200 = vrot.lane.b32.xlu0 %v45, 16
    %v201 = vpop.permute.xlu0 %200
    %202 = vrot.lane.b32.xlu0 %v46, 16
    %v203 = vpop.permute.xlu0 %202
    %204 = vrot.lane.b32.xlu0 %v47, 16
    %v205 = vpop.permute.xlu0 %204
    %206 = vrot.lane.b32.xlu0 %v48, 16
    %v207 = vpop.permute.xlu0 %206
    %208 = vrot.lane.b32.xlu0 %v49, 16
    %v209 = vpop.permute.xlu0 %208
    %210 = vrot.lane.b32.xlu0 %v50, 16
    %v211 = vpop.permute.xlu0 %210
    %212 = vrot.lane.b32.xlu0 %v51, 16
    %v213 = vpop.permute.xlu0 %212
    %214 = vrot.lane.b32.xlu0 %v52, 16
    %v215 = vpop.permute.xlu0 %214
    %216 = vrot.lane.b32.xlu0 %v53, 16
    %v217 = vpop.permute.xlu0 %216
    %218 = vrot.lane.b32.xlu0 %v54, 16
    %v219 = vpop.permute.xlu0 %218
    %220 = vrot.lane.b32.xlu0 %v55, 16
    %v221 = vpop.permute.xlu0 %220
    %222 = vrot.lane.b32.xlu0 %v56, 16
    %v223 = vpop.permute.xlu0 %222
    %224 = vrot.lane.b32.xlu0 %v57, 16
    %v225 = vpop.permute.xlu0 %224
    %226 = vrot.lane.b32.xlu0 %v58, 16
    %v227 = vpop.permute.xlu0 %226
    %228 = vrot.lane.b32.xlu0 %v59, 16
    %v229 = vpop.permute.xlu0 %228
    %262 = vrot.lane.b32.xlu0 %v134, 32
    %v263 = vpop.permute.xlu0 %262
    %264 = vrot.lane.b32.xlu0 %v135, 32
    %v265 = vpop.permute.xlu0 %264
    %266 = vrot.lane.b32.xlu0 %v136, 32
    %v267 = vpop.permute.xlu0 %266
    %268 = vrot.lane.b32.xlu0 %v137, 32
    %v269 = vpop.permute.xlu0 %268
    %270 = vrot.lane.b32.xlu0 %v138, 32
    %v271 = vpop.permute.xlu0 %270
    %272 = vrot.lane.b32.xlu0 %v139, 32
    %v273 = vpop.permute.xlu0 %272
    %274 = vrot.lane.b32.xlu0 %v140, 32
    %v275 = vpop.permute.xlu0 %274
    %276 = vrot.lane.b32.xlu0 %v141, 32
    %v277 = vpop.permute.xlu0 %276
    %278 = vrot.lane.b32.xlu0 %v142, 32
    %v279 = vpop.permute.xlu0 %278
    %280 = vrot.lane.b32.xlu0 %v143, 32
    %v281 = vpop.permute.xlu0 %280
    %282 = vrot.lane.b32.xlu0 %v144, 32
    %v283 = vpop.permute.xlu0 %282
    %284 = vrot.lane.b32.xlu0 %v145, 32
    %v285 = vpop.permute.xlu0 %284
    %286 = vrot.lane.b32.xlu0 %v146, 32
    %v287 = vpop.permute.xlu0 %286
    %288 = vrot.lane.b32.xlu0 %v147, 32
    %v289 = vpop.permute.xlu0 %288
    %290 = vrot.lane.b32.xlu0 %v148, 32
    %v291 = vpop.permute.xlu0 %290
    %292 = vrot.lane.b32.xlu0 %v149, 32
    %v293 = vpop.permute.xlu0 %292
    %326 = vrot.lane.b32.xlu0 %v150, 48
    %v327 = vpop.permute.xlu0 %326
    %328 = vrot.lane.b32.xlu0 %v151, 48
    %v329 = vpop.permute.xlu0 %328
    %330 = vrot.lane.b32.xlu0 %v152, 48
    %v331 = vpop.permute.xlu0 %330
    %332 = vrot.lane.b32.xlu0 %v153, 48
    %v333 = vpop.permute.xlu0 %332
    %334 = vrot.lane.b32.xlu0 %v154, 48
    %v335 = vpop.permute.xlu0 %334
    %336 = vrot.lane.b32.xlu0 %v155, 48
    %v337 = vpop.permute.xlu0 %336
    %338 = vrot.lane.b32.xlu0 %v156, 48
    %v339 = vpop.permute.xlu0 %338
    %340 = vrot.lane.b32.xlu0 %v157, 48
    %v341 = vpop.permute.xlu0 %340
    %342 = vrot.lane.b32.xlu0 %v158, 48
    %v343 = vpop.permute.xlu0 %342
    %344 = vrot.lane.b32.xlu0 %v159, 48
    %v345 = vpop.permute.xlu0 %344
    %346 = vrot.lane.b32.xlu0 %v160, 48
    %v347 = vpop.permute.xlu0 %346
    %348 = vrot.lane.b32.xlu0 %v161, 48
    %v349 = vpop.permute.xlu0 %348
    %350 = vrot.lane.b32.xlu0 %v162, 48
    %v351 = vpop.permute.xlu0 %350
    %352 = vrot.lane.b32.xlu0 %v163, 48
    %v353 = vpop.permute.xlu0 %352
    %354 = vrot.lane.b32.xlu0 %v164, 48
    %v355 = vpop.permute.xlu0 %354
    %356 = vrot.lane.b32.xlu0 %v165, 48
    %v357 = vpop.permute.xlu0 %356
    %390 = vrot.lane.b32.xlu0 %v166, 64
    %v391 = vpop.permute.xlu0 %390
    %392 = vrot.lane.b32.xlu0 %v167, 64
    %v393 = vpop.permute.xlu0 %392
    %394 = vrot.lane.b32.xlu0 %v168, 64
    %v395 = vpop.permute.xlu0 %394
    %396 = vrot.lane.b32.xlu0 %v169, 64
    %v397 = vpop.permute.xlu0 %396
    %398 = vrot.lane.b32.xlu0 %v170, 64
    %v399 = vpop.permute.xlu0 %398
    %400 = vrot.lane.b32.xlu0 %v171, 64
    %v401 = vpop.permute.xlu0 %400
    %402 = vrot.lane.b32.xlu0 %v172, 64
    %v403 = vpop.permute.xlu0 %402
    %404 = vrot.lane.b32.xlu0 %v173, 64
    %v405 = vpop.permute.xlu0 %404
    %406 = vrot.lane.b32.xlu0 %v174, 64
    %v407 = vpop.permute.xlu0 %406
    %408 = vrot.lane.b32.xlu0 %v175, 64
    %v409 = vpop.permute.xlu0 %408
    %410 = vrot.lane.b32.xlu0 %v176, 64
    %v411 = vpop.permute.xlu0 %410
    %412 = vrot.lane.b32.xlu0 %v177, 64
    %v413 = vpop.permute.xlu0 %412
    %414 = vrot.lane.b32.xlu0 %v178, 64
    %v415 = vpop.permute.xlu0 %414
    %416 = vrot.lane.b32.xlu0 %v179, 64
    %v417 = vpop.permute.xlu0 %416
    %418 = vrot.lane.b32.xlu0 %v180, 64
    %v419 = vpop.permute.xlu0 %418
    %420 = vrot.lane.b32.xlu0 %v181, 64
    %v421 = vpop.permute.xlu0 %420
    %v438 = vsel %vm93, %v28, %v199
    %v439 = vsel %vm93, %v29, %v201
    %v440 = vsel %vm93, %v30, %v203
    %v441 = vsel %vm93, %v31, %v205
    %v442 = vsel %vm93, %v32, %v207
    %v443 = vsel %vm93, %v33, %v209
    %v444 = vsel %vm93, %v34, %v211
    %v445 = vsel %vm93, %v35, %v213
    %v446 = vsel %vm93, %v36, %v215
    %v447 = vsel %vm93, %v37, %v217
    %v448 = vsel %vm93, %v38, %v219
    %v449 = vsel %vm93, %v39, %v221
    %v450 = vsel %vm93, %v40, %v223
    %v451 = vsel %vm93, %v41, %v225
    %v452 = vsel %vm93, %v42, %v227
    %v453 = vsel %vm93, %v43, %v229
    %vm454 = vcmask 261120
    %v455 = vsel %vm454, %v438, %v263
    %v456 = vsel %vm454, %v439, %v265
    %v457 = vsel %vm454, %v440, %v267
    %v458 = vsel %vm454, %v441, %v269
    %v459 = vsel %vm454, %v442, %v271
    %v460 = vsel %vm454, %v443, %v273
    %v461 = vsel %vm454, %v444, %v275
    %v462 = vsel %vm454, %v445, %v277
    %v463 = vsel %vm454, %v446, %v279
    %v464 = vsel %vm454, %v447, %v281
    %v465 = vsel %vm454, %v448, %v283
    %v466 = vsel %vm454, %v449, %v285
    %v467 = vsel %vm454, %v450, %v287
    %v468 = vsel %vm454, %v451, %v289
    %v469 = vsel %vm454, %v452, %v291
    %v470 = vsel %vm454, %v453, %v293
    %vm471 = vcmask 392192
    %v472 = vsel %vm471, %v455, %v327
    %v473 = vsel %vm471, %v456, %v329
    %v474 = vsel %vm471, %v457, %v331
    %v475 = vsel %vm471, %v458, %v333
    %v476 = vsel %vm471, %v459, %v335
    %v477 = vsel %vm471, %v460, %v337
    %v478 = vsel %vm471, %v461, %v339
    %v479 = vsel %vm471, %v462, %v341
    %v480 = vsel %vm471, %v463, %v343
    %v481 = vsel %vm471, %v464, %v345
    %v482 = vsel %vm471, %v465, %v347
    %v483 = vsel %vm471, %v466, %v349
    %v484 = vsel %vm471, %v467, %v351
    %v485 = vsel %vm471, %v468, %v353
    %v486 = vsel %vm471, %v469, %v355
    %v487 = vsel %vm471, %v470, %v357
    %vm488 = vcmask 523264
    %v489 = vsel %vm488, %v472, %v391
    %v490 = vsel %vm488, %v473, %v393
    %v491 = vsel %vm488, %v474, %v395
    %v492 = vsel %vm488, %v475, %v397
    %v493 = vsel %vm488, %v476, %v399
    %v494 = vsel %vm488, %v477, %v401
    %v495 = vsel %vm488, %v478, %v403
    %v496 = vsel %vm488, %v479, %v405
    %v497 = vsel %vm488, %v480, %v407
    %v498 = vsel %vm488, %v481, %v409
    %v499 = vsel %vm488, %v482, %v411
    %v500 = vsel %vm488, %v483, %v413
    %v501 = vsel %vm488, %v484, %v415
    %v502 = vsel %vm488, %v485, %v417
    %v503 = vsel %vm488, %v486, %v419
    %v504 = vsel %vm488, %v487, %v421
    %v505 = vld [vmem:[%s0] sm:$0xff]
    %v506 = vld [vmem:[%s0 + $0x8] sm:$0xff]
    %v507 = vld [vmem:[%s0 + $0x10] sm:$0xff]
    %v508 = vld [vmem:[%s0 + $0x18] sm:$0xff]
    %v509 = vld [vmem:[%s0 + $0x20] sm:$0xff]
    %v510 = vld [vmem:[%s0 + $0x28] sm:$0xff]
    %v511 = vld [vmem:[%s0 + $0x30] sm:$0xff]
    %v512 = vld [vmem:[%s0 + $0x38] sm:$0xff]
    %v513 = vld [vmem:[%s0 + $0x40] sm:$0xff]
    %v514 = vld [vmem:[%s0 + $0x48] sm:$0xff]
    %v515 = vld [vmem:[%s0 + $0x50] sm:$0xff]
    %v516 = vld [vmem:[%s0 + $0x58] sm:$0xff]
    %v517 = vld [vmem:[%s0 + $0x60] sm:$0xff]
    %v518 = vld [vmem:[%s0 + $0x68] sm:$0xff]
    %v519 = vld [vmem:[%s0 + $0x70] sm:$0xff]
    %v520 = vld [vmem:[%s0 + $0x78] sm:$0xff]
    %521 = vmatpush.msra.mxu0 %v504
    %522 = vmatpush.msra.mxu0 %v503
    %523 = vmatpush.msra.mxu0 %v502
    %524 = vmatpush.msra.mxu0 %v501
    %525 = vmatpush.msra.mxu0 %v500
    %526 = vmatpush.msra.mxu0 %v499
    %527 = vmatpush.msra.mxu0 %v498
    %528 = vmatpush.msra.mxu0 %v497
    %529 = vmatpush.msra.mxu0 %v496
    %530 = vmatpush.msra.mxu0 %v495
    %531 = vmatpush.msra.mxu0 %v494
    %532 = vmatpush.msra.mxu0 %v493
    %533 = vmatpush.msra.mxu0 %v492
    %534 = vmatpush.msra.mxu0 %v491
    %535 = vmatpush.msra.mxu0 %v490
    %536 = vmatpush.msra.mxu0 %v489
    %537 = vmatmul.f32.gmra.mxu0 %v505
    %v538 = vpop.f32.mrf.mxu0
    %v539 = vadd.f32 0.0, %v538
    %540 = vmatmul.f32.gmra.mxu0 %v506
    %v541 = vpop.f32.mrf.mxu0
    %v542 = vadd.f32 0.0, %v541
    %543 = vmatmul.f32.gmra.mxu0 %v507
    %v544 = vpop.f32.mrf.mxu0
    %v545 = vadd.f32 0.0, %v544
    %546 = vmatmul.f32.gmra.mxu0 %v508
    %v547 = vpop.f32.mrf.mxu0
    %v548 = vadd.f32 0.0, %v547
    %549 = vmatmul.f32.gmra.mxu0 %v509
    %v550 = vpop.f32.mrf.mxu0
    %v551 = vadd.f32 0.0, %v550
    %552 = vmatmul.f32.gmra.mxu0 %v510
    %v553 = vpop.f32.mrf.mxu0
    %v554 = vadd.f32 0.0, %v553
    %555 = vmatmul.f32.gmra.mxu0 %v511
    %v556 = vpop.f32.mrf.mxu0
    %v557 = vadd.f32 0.0, %v556
    %558 = vmatmul.f32.gmra.mxu0 %v512
    %v559 = vpop.f32.mrf.mxu0
    %v560 = vadd.f32 0.0, %v559
    %561 = vmatmul.f32.gmra.mxu0 %v513
    %v562 = vpop.f32.mrf.mxu0
    %v563 = vadd.f32 0.0, %v562
    %564 = vmatmul.f32.gmra.mxu0 %v514
    %v565 = vpop.f32.mrf.mxu0
    %v566 = vadd.f32 0.0, %v565
    %567 = vmatmul.f32.gmra.mxu0 %v515
    %v568 = vpop.f32.mrf.mxu0
    %v569 = vadd.f32 0.0, %v568
    %570 = vmatmul.f32.gmra.mxu0 %v516
    %v571 = vpop.f32.mrf.mxu0
    %v572 = vadd.f32 0.0, %v571
    %573 = vmatmul.f32.gmra.mxu0 %v517
    %v574 = vpop.f32.mrf.mxu0
    %v575 = vadd.f32 0.0, %v574
    %576 = vmatmul.f32.gmra.mxu0 %v518
    %v577 = vpop.f32.mrf.mxu0
    %v578 = vadd.f32 0.0, %v577
    %579 = vmatmul.f32.gmra.mxu0 %v519
    %v580 = vpop.f32.mrf.mxu0
    %v581 = vadd.f32 0.0, %v580
    %582 = vmatmul.f32.gmra.mxu0 %v520
    %v583 = vpop.f32.mrf.mxu0
    %v584 = vadd.f32 0.0, %v583
    %585 = vdwg.mxu0
    %v586 = vld [vmem:[%s1] sm:$0xff]
    %v587 = vld [vmem:[%s1 + $0x8] sm:$0xff]
    %v588 = vld [vmem:[%s1 + $0x10] sm:$0xff]
    %v589 = vld [vmem:[%s1 + $0x18] sm:$0xff]
    %v590 = vld [vmem:[%s1 + $0x20] sm:$0xff]
    %v591 = vld [vmem:[%s1 + $0x28] sm:$0xff]
    %v592 = vld [vmem:[%s1 + $0x30] sm:$0xff]
    %v593 = vld [vmem:[%s1 + $0x38] sm:$0xff]
    %v594 = vld [vmem:[%s1 + $0x40] sm:$0xff]
    %v595 = vld [vmem:[%s1 + $0x48] sm:$0xff]
    %vm596 = vcmask 654336
    %v598 = vsel %vm596, %v539, 0
    %v601 = vsel %vm596, %v542, 0
    %v604 = vsel %vm596, %v545, 0
    %v607 = vsel %vm596, %v548, 0
    %v610 = vsel %vm596, %v551, 0
    %v613 = vsel %vm596, %v554, 0
    %v616 = vsel %vm596, %v557, 0
    %v619 = vsel %vm596, %v560, 0
    %v622 = vsel %vm596, %v563, 0
    %v625 = vsel %vm596, %v566, 0
    %v628 = vsel %vm596, %v569, 0
    %v631 = vsel %vm596, %v572, 0
    %v634 = vsel %vm596, %v575, 0
    %v637 = vsel %vm596, %v578, 0
    %v640 = vsel %vm596, %v581, 0
    %v643 = vsel %vm596, %v584, 0
    %645 = vmatpush.msra.mxu0 0.0
    %646 = vmatpush.msra.mxu0 0.0
    %647 = vmatpush.msra.mxu0 0.0
    %648 = vmatpush.msra.mxu0 0.0
    %649 = vmatpush.msra.mxu0 0.0
    %650 = vmatpush.msra.mxu0 0.0
    %651 = vmatpush.msra.mxu0 %v595
    %652 = vmatpush.msra.mxu0 %v594
    %653 = vmatpush.msra.mxu0 %v593
    %654 = vmatpush.msra.mxu0 %v592
    %655 = vmatpush.msra.mxu0 %v591
    %656 = vmatpush.msra.mxu0 %v590
    %657 = vmatpush.msra.mxu0 %v589
    %658 = vmatpush.msra.mxu0 %v588
    %659 = vmatpush.msra.mxu0 %v587
    %660 = vmatpush.msra.mxu0 %v586
    %661 = vmatmul.f32.gmra.mxu0 %v598
    %v662 = vpop.f32.mrf.mxu0
    %v663 = vadd.f32 0.0, %v662
    %664 = vmatmul.f32.gmra.mxu0 %v601
    %v665 = vpop.f32.mrf.mxu0
    %v666 = vadd.f32 0.0, %v665
    %667 = vmatmul.f32.gmra.mxu0 %v604
    %v668 = vpop.f32.mrf.mxu0
    %v669 = vadd.f32 0.0, %v668
    %670 = vmatmul.f32.gmra.mxu0 %v607
    %v671 = vpop.f32.mrf.mxu0
    %v672 = vadd.f32 0.0, %v671
    %673 = vmatmul.f32.gmra.mxu0 %v610
    %v674 = vpop.f32.mrf.mxu0
    %v675 = vadd.f32 0.0, %v674
    %676 = vmatmul.f32.gmra.mxu0 %v613
    %v677 = vpop.f32.mrf.mxu0
    %v678 = vadd.f32 0.0, %v677
    %679 = vmatmul.f32.gmra.mxu0 %v616
    %v680 = vpop.f32.mrf.mxu0
    %v681 = vadd.f32 0.0, %v680
    %682 = vmatmul.f32.gmra.mxu0 %v619
    %v683 = vpop.f32.mrf.mxu0
    %v684 = vadd.f32 0.0, %v683
    %685 = vmatmul.f32.gmra.mxu0 %v622
    %v686 = vpop.f32.mrf.mxu0
    %v687 = vadd.f32 0.0, %v686
    %688 = vmatmul.f32.gmra.mxu0 %v625
    %v689 = vpop.f32.mrf.mxu0
    %v690 = vadd.f32 0.0, %v689
    %691 = vmatmul.f32.gmra.mxu0 %v628
    %v692 = vpop.f32.mrf.mxu0
    %v693 = vadd.f32 0.0, %v692
    %694 = vmatmul.f32.gmra.mxu0 %v631
    %v695 = vpop.f32.mrf.mxu0
    %v696 = vadd.f32 0.0, %v695
    %697 = vmatmul.f32.gmra.mxu0 %v634
    %v698 = vpop.f32.mrf.mxu0
    %v699 = vadd.f32 0.0, %v698
    %700 = vmatmul.f32.gmra.mxu0 %v637
    %v701 = vpop.f32.mrf.mxu0
    %v702 = vadd.f32 0.0, %v701
    %703 = vmatmul.f32.gmra.mxu0 %v640
    %v704 = vpop.f32.mrf.mxu0
    %v705 = vadd.f32 0.0, %v704
    %706 = vmatmul.f32.gmra.mxu0 %v643
    %v707 = vpop.f32.mrf.mxu0
    %v708 = vadd.f32 0.0, %v707
    %709 = vdwg.mxu0
    %v710 = vmul.f32 %v663, %v663
    %v711 = vmul.f32 %v666, %v666
    %v712 = vmul.f32 %v669, %v669
    %v713 = vmul.f32 %v672, %v672
    %v714 = vmul.f32 %v675, %v675
    %v715 = vmul.f32 %v678, %v678
    %v716 = vmul.f32 %v681, %v681
    %v717 = vmul.f32 %v684, %v684
    %v718 = vmul.f32 %v687, %v687
    %v719 = vmul.f32 %v690, %v690
    %v720 = vmul.f32 %v693, %v693
    %v721 = vmul.f32 %v696, %v696
    %v722 = vmul.f32 %v699, %v699
    %v723 = vmul.f32 %v702, %v702
    %v724 = vmul.f32 %v705, %v705
    %v725 = vmul.f32 %v708, %v708
    %742 = vrot.lane.b32.xlu0 %v663, 112
    %v743 = vpop.permute.xlu0 %742
    %744 = vrot.lane.b32.xlu0 %v666, 112
    %v745 = vpop.permute.xlu0 %744
    %746 = vrot.lane.b32.xlu0 %v669, 112
    %v747 = vpop.permute.xlu0 %746
    %748 = vrot.lane.b32.xlu0 %v672, 112
    %v749 = vpop.permute.xlu0 %748
    %750 = vrot.lane.b32.xlu0 %v675, 112
    %v751 = vpop.permute.xlu0 %750
    %752 = vrot.lane.b32.xlu0 %v678, 112
    %v753 = vpop.permute.xlu0 %752
    %754 = vrot.lane.b32.xlu0 %v681, 112
    %v755 = vpop.permute.xlu0 %754
    %756 = vrot.lane.b32.xlu0 %v684, 112
    %v757 = vpop.permute.xlu0 %756
    %758 = vrot.lane.b32.xlu0 %v687, 112
    %v759 = vpop.permute.xlu0 %758
    %760 = vrot.lane.b32.xlu0 %v690, 112
    %v761 = vpop.permute.xlu0 %760
    %762 = vrot.lane.b32.xlu0 %v693, 112
    %v763 = vpop.permute.xlu0 %762
    %764 = vrot.lane.b32.xlu0 %v696, 112
    %v765 = vpop.permute.xlu0 %764
    %766 = vrot.lane.b32.xlu0 %v699, 112
    %v767 = vpop.permute.xlu0 %766
    %768 = vrot.lane.b32.xlu0 %v702, 112
    %v769 = vpop.permute.xlu0 %768
    %770 = vrot.lane.b32.xlu0 %v705, 112
    %v771 = vpop.permute.xlu0 %770
    %772 = vrot.lane.b32.xlu0 %v708, 112
    %v773 = vpop.permute.xlu0 %772
    %v790 = vmul.f32 %v663, %v743
    %v791 = vmul.f32 %v666, %v745
    %v792 = vmul.f32 %v669, %v747
    %v793 = vmul.f32 %v672, %v749
    %v794 = vmul.f32 %v675, %v751
    %v795 = vmul.f32 %v678, %v753
    %v796 = vmul.f32 %v681, %v755
    %v797 = vmul.f32 %v684, %v757
    %v798 = vmul.f32 %v687, %v759
    %v799 = vmul.f32 %v690, %v761
    %v800 = vmul.f32 %v693, %v763
    %v801 = vmul.f32 %v696, %v765
    %v802 = vmul.f32 %v699, %v767
    %v803 = vmul.f32 %v702, %v769
    %v804 = vmul.f32 %v705, %v771
    %v805 = vmul.f32 %v708, %v773
    %822 = vrot.lane.b32.xlu0 %v710, 32
    %v823 = vpop.permute.xlu0 %822
    %824 = vrot.lane.b32.xlu0 %v711, 32
    %v825 = vpop.permute.xlu0 %824
    %826 = vrot.lane.b32.xlu0 %v712, 32
    %v827 = vpop.permute.xlu0 %826
    %828 = vrot.lane.b32.xlu0 %v713, 32
    %v829 = vpop.permute.xlu0 %828
    %830 = vrot.lane.b32.xlu0 %v714, 32
    %v831 = vpop.permute.xlu0 %830
    %832 = vrot.lane.b32.xlu0 %v715, 32
    %v833 = vpop.permute.xlu0 %832
    %834 = vrot.lane.b32.xlu0 %v716, 32
    %v835 = vpop.permute.xlu0 %834
    %836 = vrot.lane.b32.xlu0 %v717, 32
    %v837 = vpop.permute.xlu0 %836
    %838 = vrot.lane.b32.xlu0 %v718, 32
    %v839 = vpop.permute.xlu0 %838
    %840 = vrot.lane.b32.xlu0 %v719, 32
    %v841 = vpop.permute.xlu0 %840
    %842 = vrot.lane.b32.xlu0 %v720, 32
    %v843 = vpop.permute.xlu0 %842
    %844 = vrot.lane.b32.xlu0 %v721, 32
    %v845 = vpop.permute.xlu0 %844
    %846 = vrot.lane.b32.xlu0 %v722, 32
    %v847 = vpop.permute.xlu0 %846
    %848 = vrot.lane.b32.xlu0 %v723, 32
    %v849 = vpop.permute.xlu0 %848
    %850 = vrot.lane.b32.xlu0 %v724, 32
    %v851 = vpop.permute.xlu0 %850
    %852 = vrot.lane.b32.xlu0 %v725, 32
    %v853 = vpop.permute.xlu0 %852
    %v870 = vsub.f32 %v663, %v823
    %v871 = vsub.f32 %v666, %v825
    %v872 = vsub.f32 %v669, %v827
    %v873 = vsub.f32 %v672, %v829
    %v874 = vsub.f32 %v675, %v831
    %v875 = vsub.f32 %v678, %v833
    %v876 = vsub.f32 %v681, %v835
    %v877 = vsub.f32 %v684, %v837
    %v878 = vsub.f32 %v687, %v839
    %v879 = vsub.f32 %v690, %v841
    %v880 = vsub.f32 %v693, %v843
    %v881 = vsub.f32 %v696, %v845
    %v882 = vsub.f32 %v699, %v847
    %v883 = vsub.f32 %v702, %v849
    %v884 = vsub.f32 %v705, %v851
    %v885 = vsub.f32 %v708, %v853
    %902 = vrot.lane.b32.xlu0 %v790, 64
    %v903 = vpop.permute.xlu0 %902
    %904 = vrot.lane.b32.xlu0 %v791, 64
    %v905 = vpop.permute.xlu0 %904
    %906 = vrot.lane.b32.xlu0 %v792, 64
    %v907 = vpop.permute.xlu0 %906
    %908 = vrot.lane.b32.xlu0 %v793, 64
    %v909 = vpop.permute.xlu0 %908
    %910 = vrot.lane.b32.xlu0 %v794, 64
    %v911 = vpop.permute.xlu0 %910
    %912 = vrot.lane.b32.xlu0 %v795, 64
    %v913 = vpop.permute.xlu0 %912
    %914 = vrot.lane.b32.xlu0 %v796, 64
    %v915 = vpop.permute.xlu0 %914
    %916 = vrot.lane.b32.xlu0 %v797, 64
    %v917 = vpop.permute.xlu0 %916
    %918 = vrot.lane.b32.xlu0 %v798, 64
    %v919 = vpop.permute.xlu0 %918
    %920 = vrot.lane.b32.xlu0 %v799, 64
    %v921 = vpop.permute.xlu0 %920
    %922 = vrot.lane.b32.xlu0 %v800, 64
    %v923 = vpop.permute.xlu0 %922
    %924 = vrot.lane.b32.xlu0 %v801, 64
    %v925 = vpop.permute.xlu0 %924
    %926 = vrot.lane.b32.xlu0 %v802, 64
    %v927 = vpop.permute.xlu0 %926
    %928 = vrot.lane.b32.xlu0 %v803, 64
    %v929 = vpop.permute.xlu0 %928
    %930 = vrot.lane.b32.xlu0 %v804, 64
    %v931 = vpop.permute.xlu0 %930
    %932 = vrot.lane.b32.xlu0 %v805, 64
    %v933 = vpop.permute.xlu0 %932
    %v950 = vsub.f32 %v663, %v903
    %v951 = vsub.f32 %v666, %v905
    %v952 = vsub.f32 %v669, %v907
    %v953 = vsub.f32 %v672, %v909
    %v954 = vsub.f32 %v675, %v911
    %v955 = vsub.f32 %v678, %v913
    %v956 = vsub.f32 %v681, %v915
    %v957 = vsub.f32 %v684, %v917
    %v958 = vsub.f32 %v687, %v919
    %v959 = vsub.f32 %v690, %v921
    %v960 = vsub.f32 %v693, %v923
    %v961 = vsub.f32 %v696, %v925
    %v962 = vsub.f32 %v699, %v927
    %v963 = vsub.f32 %v702, %v929
    %v964 = vsub.f32 %v705, %v931
    %v965 = vsub.f32 %v708, %v933
    %v966 = vmul.f32 %v790, 2.0
    %v967 = vmul.f32 %v791, 2.0
    %v968 = vmul.f32 %v792, 2.0
    %v969 = vmul.f32 %v793, 2.0
    %v970 = vmul.f32 %v794, 2.0
    %v971 = vmul.f32 %v795, 2.0
    %v972 = vmul.f32 %v796, 2.0
    %v973 = vmul.f32 %v797, 2.0
    %v974 = vmul.f32 %v798, 2.0
    %v975 = vmul.f32 %v799, 2.0
    %v976 = vmul.f32 %v800, 2.0
    %v977 = vmul.f32 %v801, 2.0
    %v978 = vmul.f32 %v802, 2.0
    %v979 = vmul.f32 %v803, 2.0
    %v980 = vmul.f32 %v804, 2.0
    %v981 = vmul.f32 %v805, 2.0
    %v982 = vadd.f32 %v966, 0.0001
    %v983 = vadd.f32 %v967, 0.0001
    %v984 = vadd.f32 %v968, 0.0001
    %v985 = vadd.f32 %v969, 0.0001
    %v986 = vadd.f32 %v970, 0.0001
    %v987 = vadd.f32 %v971, 0.0001
    %v988 = vadd.f32 %v972, 0.0001
    %v989 = vadd.f32 %v973, 0.0001
    %v990 = vadd.f32 %v974, 0.0001
    %v991 = vadd.f32 %v975, 0.0001
    %v992 = vadd.f32 %v976, 0.0001
    %v993 = vadd.f32 %v977, 0.0001
    %v994 = vadd.f32 %v978, 0.0001
    %v995 = vadd.f32 %v979, 0.0001
    %v996 = vadd.f32 %v980, 0.0001
    %v997 = vadd.f32 %v981, 0.0001
    %v998 = vmul.f32 %v950, 2.0
    %v999 = vmul.f32 %v951, 2.0
    %v1000 = vmul.f32 %v952, 2.0
    %v1001 = vmul.f32 %v953, 2.0
    %v1002 = vmul.f32 %v954, 2.0
    %v1003 = vmul.f32 %v955, 2.0
    %v1004 = vmul.f32 %v956, 2.0
    %v1005 = vmul.f32 %v957, 2.0
    %v1006 = vmul.f32 %v958, 2.0
    %v1007 = vmul.f32 %v959, 2.0
    %v1008 = vmul.f32 %v960, 2.0
    %v1009 = vmul.f32 %v961, 2.0
    %v1010 = vmul.f32 %v962, 2.0
    %v1011 = vmul.f32 %v963, 2.0
    %v1012 = vmul.f32 %v964, 2.0
    %v1013 = vmul.f32 %v965, 2.0
    %v1014 = vadd.f32 %v998, 0.0009
    %v1015 = vadd.f32 %v999, 0.0009
    %v1016 = vadd.f32 %v1000, 0.0009
    %v1017 = vadd.f32 %v1001, 0.0009
    %v1018 = vadd.f32 %v1002, 0.0009
    %v1019 = vadd.f32 %v1003, 0.0009
    %v1020 = vadd.f32 %v1004, 0.0009
    %v1021 = vadd.f32 %v1005, 0.0009
    %v1022 = vadd.f32 %v1006, 0.0009
    %v1023 = vadd.f32 %v1007, 0.0009
    %v1024 = vadd.f32 %v1008, 0.0009
    %v1025 = vadd.f32 %v1009, 0.0009
    %v1026 = vadd.f32 %v1010, 0.0009
    %v1027 = vadd.f32 %v1011, 0.0009
    %v1028 = vadd.f32 %v1012, 0.0009
    %v1029 = vadd.f32 %v1013, 0.0009
    %1046 = vrot.lane.b32.xlu0 %v1014, 64
    %v1047 = vpop.permute.xlu0 %1046
    %1048 = vrot.lane.b32.xlu0 %v1015, 64
    %v1049 = vpop.permute.xlu0 %1048
    %1050 = vrot.lane.b32.xlu0 %v1016, 64
    %v1051 = vpop.permute.xlu0 %1050
    %1052 = vrot.lane.b32.xlu0 %v1017, 64
    %v1053 = vpop.permute.xlu0 %1052
    %1054 = vrot.lane.b32.xlu0 %v1018, 64
    %v1055 = vpop.permute.xlu0 %1054
    %1056 = vrot.lane.b32.xlu0 %v1019, 64
    %v1057 = vpop.permute.xlu0 %1056
    %1058 = vrot.lane.b32.xlu0 %v1020, 64
    %v1059 = vpop.permute.xlu0 %1058
    %1060 = vrot.lane.b32.xlu0 %v1021, 64
    %v1061 = vpop.permute.xlu0 %1060
    %1062 = vrot.lane.b32.xlu0 %v1022, 64
    %v1063 = vpop.permute.xlu0 %1062
    %1064 = vrot.lane.b32.xlu0 %v1023, 64
    %v1065 = vpop.permute.xlu0 %1064
    %1066 = vrot.lane.b32.xlu0 %v1024, 64
    %v1067 = vpop.permute.xlu0 %1066
    %1068 = vrot.lane.b32.xlu0 %v1025, 64
    %v1069 = vpop.permute.xlu0 %1068
    %1070 = vrot.lane.b32.xlu0 %v1026, 64
    %v1071 = vpop.permute.xlu0 %1070
    %1072 = vrot.lane.b32.xlu0 %v1027, 64
    %v1073 = vpop.permute.xlu0 %1072
    %1074 = vrot.lane.b32.xlu0 %v1028, 64
    %v1075 = vpop.permute.xlu0 %1074
    %1076 = vrot.lane.b32.xlu0 %v1029, 64
    %v1077 = vpop.permute.xlu0 %1076
    %v1094 = vmul.f32 %v982, %v1047
    %v1095 = vmul.f32 %v983, %v1049
    %v1096 = vmul.f32 %v984, %v1051
    %v1097 = vmul.f32 %v985, %v1053
    %v1098 = vmul.f32 %v986, %v1055
    %v1099 = vmul.f32 %v987, %v1057
    %v1100 = vmul.f32 %v988, %v1059
    %v1101 = vmul.f32 %v989, %v1061
    %v1102 = vmul.f32 %v990, %v1063
    %v1103 = vmul.f32 %v991, %v1065
    %v1104 = vmul.f32 %v992, %v1067
    %v1105 = vmul.f32 %v993, %v1069
    %v1106 = vmul.f32 %v994, %v1071
    %v1107 = vmul.f32 %v995, %v1073
    %v1108 = vmul.f32 %v996, %v1075
    %v1109 = vmul.f32 %v997, %v1077
    %1110 = vrot.lane.b32.xlu0 %v710, 112
    %v1111 = vpop.permute.xlu0 %1110
    %1112 = vrot.lane.b32.xlu0 %v711, 112
    %v1113 = vpop.permute.xlu0 %1112
    %1114 = vrot.lane.b32.xlu0 %v712, 112
    %v1115 = vpop.permute.xlu0 %1114
    %1116 = vrot.lane.b32.xlu0 %v713, 112
    %v1117 = vpop.permute.xlu0 %1116
    %1118 = vrot.lane.b32.xlu0 %v714, 112
    %v1119 = vpop.permute.xlu0 %1118
    %1120 = vrot.lane.b32.xlu0 %v715, 112
    %v1121 = vpop.permute.xlu0 %1120
    %1122 = vrot.lane.b32.xlu0 %v716, 112
    %v1123 = vpop.permute.xlu0 %1122
    %1124 = vrot.lane.b32.xlu0 %v717, 112
    %v1125 = vpop.permute.xlu0 %1124
    %1126 = vrot.lane.b32.xlu0 %v718, 112
    %v1127 = vpop.permute.xlu0 %1126
    %1128 = vrot.lane.b32.xlu0 %v719, 112
    %v1129 = vpop.permute.xlu0 %1128
    %1130 = vrot.lane.b32.xlu0 %v720, 112
    %v1131 = vpop.permute.xlu0 %1130
    %1132 = vrot.lane.b32.xlu0 %v721, 112
    %v1133 = vpop.permute.xlu0 %1132
    %1134 = vrot.lane.b32.xlu0 %v722, 112
    %v1135 = vpop.permute.xlu0 %1134
    %1136 = vrot.lane.b32.xlu0 %v723, 112
    %v1137 = vpop.permute.xlu0 %1136
    %1138 = vrot.lane.b32.xlu0 %v724, 112
    %v1139 = vpop.permute.xlu0 %1138
    %1140 = vrot.lane.b32.xlu0 %v725, 112
    %v1141 = vpop.permute.xlu0 %1140
    %v1158 = vadd.f32 %v710, %v1111
    %v1159 = vadd.f32 %v711, %v1113
    %v1160 = vadd.f32 %v712, %v1115
    %v1161 = vadd.f32 %v713, %v1117
    %v1162 = vadd.f32 %v714, %v1119
    %v1163 = vadd.f32 %v715, %v1121
    %v1164 = vadd.f32 %v716, %v1123
    %v1165 = vadd.f32 %v717, %v1125
    %v1166 = vadd.f32 %v718, %v1127
    %v1167 = vadd.f32 %v719, %v1129
    %v1168 = vadd.f32 %v720, %v1131
    %v1169 = vadd.f32 %v721, %v1133
    %v1170 = vadd.f32 %v722, %v1135
    %v1171 = vadd.f32 %v723, %v1137
    %v1172 = vadd.f32 %v724, %v1139
    %v1173 = vadd.f32 %v725, %v1141
    %v1174 = vadd.f32 %v1158, 0.0001
    %v1175 = vadd.f32 %v1159, 0.0001
    %v1176 = vadd.f32 %v1160, 0.0001
    %v1177 = vadd.f32 %v1161, 0.0001
    %v1178 = vadd.f32 %v1162, 0.0001
    %v1179 = vadd.f32 %v1163, 0.0001
    %v1180 = vadd.f32 %v1164, 0.0001
    %v1181 = vadd.f32 %v1165, 0.0001
    %v1182 = vadd.f32 %v1166, 0.0001
    %v1183 = vadd.f32 %v1167, 0.0001
    %v1184 = vadd.f32 %v1168, 0.0001
    %v1185 = vadd.f32 %v1169, 0.0001
    %v1186 = vadd.f32 %v1170, 0.0001
    %v1187 = vadd.f32 %v1171, 0.0001
    %v1188 = vadd.f32 %v1172, 0.0001
    %v1189 = vadd.f32 %v1173, 0.0001
    %1206 = vrot.lane.b32.xlu0 %v870, 112
    %v1207 = vpop.permute.xlu0 %1206
    %1208 = vrot.lane.b32.xlu0 %v871, 112
    %v1209 = vpop.permute.xlu0 %1208
    %1210 = vrot.lane.b32.xlu0 %v872, 112
    %v1211 = vpop.permute.xlu0 %1210
    %1212 = vrot.lane.b32.xlu0 %v873, 112
    %v1213 = vpop.permute.xlu0 %1212
    %1214 = vrot.lane.b32.xlu0 %v874, 112
    %v1215 = vpop.permute.xlu0 %1214
    %1216 = vrot.lane.b32.xlu0 %v875, 112
    %v1217 = vpop.permute.xlu0 %1216
    %1218 = vrot.lane.b32.xlu0 %v876, 112
    %v1219 = vpop.permute.xlu0 %1218
    %1220 = vrot.lane.b32.xlu0 %v877, 112
    %v1221 = vpop.permute.xlu0 %1220
    %1222 = vrot.lane.b32.xlu0 %v878, 112
    %v1223 = vpop.permute.xlu0 %1222
    %1224 = vrot.lane.b32.xlu0 %v879, 112
    %v1225 = vpop.permute.xlu0 %1224
    %1226 = vrot.lane.b32.xlu0 %v880, 112
    %v1227 = vpop.permute.xlu0 %1226
    %1228 = vrot.lane.b32.xlu0 %v881, 112
    %v1229 = vpop.permute.xlu0 %1228
    %1230 = vrot.lane.b32.xlu0 %v882, 112
    %v1231 = vpop.permute.xlu0 %1230
    %1232 = vrot.lane.b32.xlu0 %v883, 112
    %v1233 = vpop.permute.xlu0 %1232
    %1234 = vrot.lane.b32.xlu0 %v884, 112
    %v1235 = vpop.permute.xlu0 %1234
    %1236 = vrot.lane.b32.xlu0 %v885, 112
    %v1237 = vpop.permute.xlu0 %1236
    %v1254 = vadd.f32 %v870, %v1207
    %v1255 = vadd.f32 %v871, %v1209
    %v1256 = vadd.f32 %v872, %v1211
    %v1257 = vadd.f32 %v873, %v1213
    %v1258 = vadd.f32 %v874, %v1215
    %v1259 = vadd.f32 %v875, %v1217
    %v1260 = vadd.f32 %v876, %v1219
    %v1261 = vadd.f32 %v877, %v1221
    %v1262 = vadd.f32 %v878, %v1223
    %v1263 = vadd.f32 %v879, %v1225
    %v1264 = vadd.f32 %v880, %v1227
    %v1265 = vadd.f32 %v881, %v1229
    %v1266 = vadd.f32 %v882, %v1231
    %v1267 = vadd.f32 %v883, %v1233
    %v1268 = vadd.f32 %v884, %v1235
    %v1269 = vadd.f32 %v885, %v1237
    %v1270 = vadd.f32 %v1254, 0.0009
    %v1271 = vadd.f32 %v1255, 0.0009
    %v1272 = vadd.f32 %v1256, 0.0009
    %v1273 = vadd.f32 %v1257, 0.0009
    %v1274 = vadd.f32 %v1258, 0.0009
    %v1275 = vadd.f32 %v1259, 0.0009
    %v1276 = vadd.f32 %v1260, 0.0009
    %v1277 = vadd.f32 %v1261, 0.0009
    %v1278 = vadd.f32 %v1262, 0.0009
    %v1279 = vadd.f32 %v1263, 0.0009
    %v1280 = vadd.f32 %v1264, 0.0009
    %v1281 = vadd.f32 %v1265, 0.0009
    %v1282 = vadd.f32 %v1266, 0.0009
    %v1283 = vadd.f32 %v1267, 0.0009
    %v1284 = vadd.f32 %v1268, 0.0009
    %v1285 = vadd.f32 %v1269, 0.0009
    %1302 = vrot.lane.b32.xlu0 %v1270, 96
    %v1303 = vpop.permute.xlu0 %1302
    %1304 = vrot.lane.b32.xlu0 %v1271, 96
    %v1305 = vpop.permute.xlu0 %1304
    %1306 = vrot.lane.b32.xlu0 %v1272, 96
    %v1307 = vpop.permute.xlu0 %1306
    %1308 = vrot.lane.b32.xlu0 %v1273, 96
    %v1309 = vpop.permute.xlu0 %1308
    %1310 = vrot.lane.b32.xlu0 %v1274, 96
    %v1311 = vpop.permute.xlu0 %1310
    %1312 = vrot.lane.b32.xlu0 %v1275, 96
    %v1313 = vpop.permute.xlu0 %1312
    %1314 = vrot.lane.b32.xlu0 %v1276, 96
    %v1315 = vpop.permute.xlu0 %1314
    %1316 = vrot.lane.b32.xlu0 %v1277, 96
    %v1317 = vpop.permute.xlu0 %1316
    %1318 = vrot.lane.b32.xlu0 %v1278, 96
    %v1319 = vpop.permute.xlu0 %1318
    %1320 = vrot.lane.b32.xlu0 %v1279, 96
    %v1321 = vpop.permute.xlu0 %1320
    %1322 = vrot.lane.b32.xlu0 %v1280, 96
    %v1323 = vpop.permute.xlu0 %1322
    %1324 = vrot.lane.b32.xlu0 %v1281, 96
    %v1325 = vpop.permute.xlu0 %1324
    %1326 = vrot.lane.b32.xlu0 %v1282, 96
    %v1327 = vpop.permute.xlu0 %1326
    %1328 = vrot.lane.b32.xlu0 %v1283, 96
    %v1329 = vpop.permute.xlu0 %1328
    %1330 = vrot.lane.b32.xlu0 %v1284, 96
    %v1331 = vpop.permute.xlu0 %1330
    %1332 = vrot.lane.b32.xlu0 %v1285, 96
    %v1333 = vpop.permute.xlu0 %1332
    %v1350 = vmul.f32 %v1174, %v1303
    %v1351 = vmul.f32 %v1175, %v1305
    %v1352 = vmul.f32 %v1176, %v1307
    %v1353 = vmul.f32 %v1177, %v1309
    %v1354 = vmul.f32 %v1178, %v1311
    %v1355 = vmul.f32 %v1179, %v1313
    %v1356 = vmul.f32 %v1180, %v1315
    %v1357 = vmul.f32 %v1181, %v1317
    %v1358 = vmul.f32 %v1182, %v1319
    %v1359 = vmul.f32 %v1183, %v1321
    %v1360 = vmul.f32 %v1184, %v1323
    %v1361 = vmul.f32 %v1185, %v1325
    %v1362 = vmul.f32 %v1186, %v1327
    %v1363 = vmul.f32 %v1187, %v1329
    %v1364 = vmul.f32 %v1188, %v1331
    %v1365 = vmul.f32 %v1189, %v1333
    %v1366 = vrcp.pop %v1350
    %v1367 = vrcp.pop %v1351
    %v1368 = vrcp.pop %v1352
    %v1369 = vrcp.pop %v1353
    %v1370 = vrcp.pop %v1354
    %v1371 = vrcp.pop %v1355
    %v1372 = vrcp.pop %v1356
    %v1373 = vrcp.pop %v1357
    %v1374 = vrcp.pop %v1358
    %v1375 = vrcp.pop %v1359
    %v1376 = vrcp.pop %v1360
    %v1377 = vrcp.pop %v1361
    %v1378 = vrcp.pop %v1362
    %v1379 = vrcp.pop %v1363
    %v1380 = vrcp.pop %v1364
    %v1381 = vrcp.pop %v1365
    %v1382 = vmul.f32 %v1094, %v1366
    %v1383 = vmul.f32 %v1095, %v1367
    %v1384 = vmul.f32 %v1096, %v1368
    %v1385 = vmul.f32 %v1097, %v1369
    %v1386 = vmul.f32 %v1098, %v1370
    %v1387 = vmul.f32 %v1099, %v1371
    %v1388 = vmul.f32 %v1100, %v1372
    %v1389 = vmul.f32 %v1101, %v1373
    %v1390 = vmul.f32 %v1102, %v1374
    %v1391 = vmul.f32 %v1103, %v1375
    %v1392 = vmul.f32 %v1104, %v1376
    %v1393 = vmul.f32 %v1105, %v1377
    %v1394 = vmul.f32 %v1106, %v1378
    %v1395 = vmul.f32 %v1107, %v1379
    %v1396 = vmul.f32 %v1108, %v1380
    %v1397 = vmul.f32 %v1109, %v1381
    %v1398 = vld [vmem:[#allocation4] sm:$0x1]
    %v1399 = vsel %vm93, %v1382, 0.0
    %v1400 = vsel %vm93, %v1383, 0.0
    %v1401 = vadd.f32 %v1399, %v1400
    %v1402 = vsel %vm93, %v1384, 0.0
    %v1403 = vadd.f32 %v1401, %v1402
    %v1404 = vsel %vm93, %v1385, 0.0
    %v1405 = vadd.f32 %v1403, %v1404
    %v1406 = vsel %vm93, %v1386, 0.0
    %v1407 = vadd.f32 %v1405, %v1406
    %v1408 = vsel %vm93, %v1387, 0.0
    %v1409 = vadd.f32 %v1407, %v1408
    %v1410 = vsel %vm93, %v1388, 0.0
    %v1411 = vadd.f32 %v1409, %v1410
    %v1412 = vsel %vm93, %v1389, 0.0
    %v1413 = vadd.f32 %v1411, %v1412
    %v1414 = vsel %vm93, %v1390, 0.0
    %v1415 = vadd.f32 %v1413, %v1414
    %v1416 = vsel %vm93, %v1391, 0.0
    %v1417 = vadd.f32 %v1415, %v1416
    %v1418 = vsel %vm93, %v1392, 0.0
    %v1419 = vadd.f32 %v1417, %v1418
    %v1420 = vsel %vm93, %v1393, 0.0
    %v1421 = vadd.f32 %v1419, %v1420
    %v1422 = vsel %vm93, %v1394, 0.0
    %v1423 = vadd.f32 %v1421, %v1422
    %v1424 = vsel %vm93, %v1395, 0.0
    %v1425 = vadd.f32 %v1423, %v1424
    %v1426 = vsel %vm93, %v1396, 0.0
    %v1427 = vadd.f32 %v1425, %v1426
    %v1428 = vsel %vm93, %v1397, 0.0
    %v1429 = vadd.f32 %v1427, %v1428
    %v1430 = vrot.slane %v1429, 4
    %v1431 = vadd.f32 %v1429, %v1430
    %v1432 = vrot.slane %v1431, 2
    %v1433 = vadd.f32 %v1431, %v1432
    %v1434 = vrot.slane %v1433, 1
    %v1435 = vadd.f32 %v1433, %v1434
    %v1436 = vadd.f32 %v1398, %v1435
    %1437 = vst.msk [vmem:[#allocation4] sm:$0x1] %vm132, %v1436
    // Predicated region
    $region22: #{tpu_custom_call.1} parent=1 // pred_check
      _
    $region23: #{tpu_custom_call.1} parent=1 // pred_check_branch
      %1439 = sbr.rel (0) target = $region25
    $region24: #{tpu_custom_call.1} parent=1 // pred_region
      %1441 = vsyncadd [#allocation3], 0
      %s1443 = sshll.u32 [#allocation2], 4
      %s1444 = int_to_ptr.vmem [resolvable:$true] %s1443
      %s1445 = sshll.u32 %s4, 4
      %s1446 = int_to_ptr.hbm [resolvable:$true] %s1445
      %1448 = dma.vmem_to_hbm [thread:$0]  %s1444, 16, %s1446, [#allocation3]
    $region25: #{tpu_custom_call.1} parent=1 // pred_fallthru
      _
    // Predicated region
    $region26: #{tpu_custom_call.1} parent=1 // pred_check
      _
    $region27: #{tpu_custom_call.1} parent=1 // pred_check_branch
      %1450 = sbr.rel (0) target = $region29
    $region28: #{tpu_custom_call.1} parent=1 // pred_region
      %1452 = vsyncadd [#allocation5], 0
      %s1454 = sshll.u32 [#allocation4], 4
      %s1455 = int_to_ptr.vmem [resolvable:$true] %s1454
      %s1456 = sshll.u32 %s5, 4
      %s1457 = int_to_ptr.hbm [resolvable:$true] %s1456
      %1459 = dma.vmem_to_hbm [thread:$0]  %s1455, 16, %s1457, [#allocation5]
    $region29: #{tpu_custom_call.1} parent=1 // pred_fallthru
      _
    // Predicated region
    $region30: #{tpu_custom_call.1} parent=1 // pred_check
      _
    $region31: #{tpu_custom_call.1} parent=1 // pred_check_branch
      %1461 = sbr.rel (0) target = $region33
    $region32: #{tpu_custom_call.1} parent=1 // pred_region
      %1463 = dma.done [#allocation3], 16
    $region33: #{tpu_custom_call.1} parent=1 // pred_fallthru
      _
    // Predicated region
    $region34: #{tpu_custom_call.1} parent=1 // pred_check
      _
    $region35: #{tpu_custom_call.1} parent=1 // pred_check_branch
      %1465 = sbr.rel (0) target = $region37
    $region36: #{tpu_custom_call.1} parent=1 // pred_region
      %1467 = dma.done [#allocation5], 16
    $region37: #{tpu_custom_call.1} parent=1 // pred_fallthru
      _
    %1468 = vsyncpa [#allocation3], 1
    %1469 = vsyncpa [#allocation5], 1

</llo_original>
